<compile_context>
chip_gen: v7x
topology: tpu7x:2x2x1
jax: 0.10.0
libtpu: 0.0.40
codegen_flags: <defaults>
</compile_context>

<pallas_src>
import functools
import math

import jax
import jax.numpy as jnp
from jax.experimental import pallas as pl
from jax.experimental.pallas import tpu as pltpu


def _round_up(x, m):
    return (x + m - 1) // m * m


def _gelu_exact_f32(x):
    # nn.GELU() default = exact (erf) formulation, evaluated in f32.
    return 0.5 * x * (1.0 + jax.lax.erf(x * (1.0 / math.sqrt(2.0))))


def mlp_kernel(x_ref, w1_ref, b1_ref, w2_ref, b2_ref, o_ref, acc_ref):
    # x_ref:  (tm, C)  bf16     w1_ref: (C, th) bf16   b1_ref: (1, th) f32
    # w2_ref: (th, C)  bf16     b2_ref: (1, C)  f32
    # o_ref:  (tm, C)  f32      acc_ref: (tm, C) f32 scratch
    h_idx = pl.program_id(1)

    @pl.when(h_idx == 0)
    def _():
        acc_ref[...] = jnp.zeros_like(acc_ref)

    # First matmul (bf16 x bf16 -> f32 accumulate on the MXU).
    h = jnp.dot(x_ref[...], w1_ref[...], preferred_element_type=jnp.float32)
    h = h + b1_ref[...]
    h = _gelu_exact_f32(h)

    # Second matmul: cast activations back to bf16, accumulate in f32 scratch.
    acc_ref[...] += jnp.dot(h.astype(w2_ref.dtype), w2_ref[...],
                            preferred_element_type=jnp.float32)

    @pl.when(h_idx == pl.num_programs(1) - 1)
    def _():
        # TODO(synk): dropout left as identity (inference mode); training-mode
        # dropout would use pltpu.prng_seed + pltpu.prng_random_bits here.
        o_ref[...] = (acc_ref[...] + b2_ref[...]).astype(o_ref.dtype)


@functools.partial(jax.jit, static_argnames=("tm", "th"))
def mlp_forward(x, w1, b1, w2, b2, *, tm=256, th=512):
    """x: (B, T, C) float32 -> (B, T, C) float32.

    w1: (C, 4C), b1: (4C,) or (1, 4C), w2: (4C, C), b2: (C,) or (1, C).
    Weights are stored (in, out), i.e. the kernel computes x @ W.
    """
    B, T, C = x.shape
    H = w1.shape[1]
    M = B * T

    # Row tile: 256 default (MXU-friendly, multiple of 128 for v5e); clamp and
    # 8-align for tiny problems, pad M to a multiple of the effective tile.
    tm_eff = min(tm, _round_up(M, 8))
    M_pad = _round_up(M, tm_eff)

    # Hidden tile: 512 default; fall back to full H when it does not divide.
    th_eff = min(th, H)
    if H % th_eff != 0:
        th_eff = H

    x2 = x.reshape(M, C).astype(jnp.bfloat16)
    if M_pad != M:
        x2 = jnp.pad(x2, ((0, M_pad - M), (0, 0)))
    w1b = w1.astype(jnp.bfloat16)
    w2b = w2.astype(jnp.bfloat16)
    b1f = b1.reshape(1, H).astype(jnp.float32)
    b2f = b2.reshape(1, C).astype(jnp.float32)

    # Rough scoped-VMEM budget: double-buffered inputs/outputs + f32 scratch,
    # 2x headroom; floor at the 32 MiB default, cap below v7x's 64 MiB VMEM.
    est = (2 * (tm_eff * C * 2)        # x tile, bf16, 2 buffers
           + 2 * (C * th_eff * 2)      # W1 slice
           + 2 * (th_eff * 4)          # b1 slice
           + 2 * (th_eff * C * 2)      # W2 slice
           + 2 * (C * 4)               # b2
           + 2 * (tm_eff * C * 4)      # output tile, f32
           + tm_eff * C * 4)           # accumulator scratch
    vmem_limit = min(max(2 * est, 32 * 1024 * 1024), 60 * 1024 * 1024)

    grid = (M_pad // tm_eff, H // th_eff)

    out2 = pl.pallas_call(
        mlp_kernel,
        out_shape=jax.ShapeDtypeStruct((M_pad, C), jnp.float32),
        grid_spec=pltpu.PrefetchScalarGridSpec(
            num_scalar_prefetch=0,
            grid=grid,
            in_specs=[
                pl.BlockSpec((tm_eff, C), lambda i, h: (i, 0)),    # x tile
                pl.BlockSpec((C, th_eff), lambda i, h: (0, h)),    # W1 slice
                pl.BlockSpec((1, th_eff), lambda i, h: (0, h)),    # b1 slice
                pl.BlockSpec((th_eff, C), lambda i, h: (h, 0)),    # W2 slice
                pl.BlockSpec((1, C), lambda i, h: (0, 0)),         # b2
            ],
            out_specs=pl.BlockSpec((tm_eff, C), lambda i, h: (i, 0)),
            scratch_shapes=[pltpu.VMEM((tm_eff, C), jnp.float32)],
        ),
        compiler_params=pltpu.CompilerParams(
            dimension_semantics=("parallel", "arbitrary"),
            vmem_limit_bytes=vmem_limit),
    )(x2, w1b, b1f, w2b, b2f)

    if M_pad != M:
        out2 = out2[:M]
    return out2.reshape(B, T, C)


def init_params(key, n_embd):
    """Deterministic init mirroring nn.Linear shapes (bias=True)."""
    hidden = 4 * n_embd
    k1, k2, k3, k4 = jax.random.split(key, 4)
    # PyTorch Linear default init: U(-1/sqrt(fan_in), 1/sqrt(fan_in))
    lim1 = 1.0 / math.sqrt(n_embd)
    lim2 = 1.0 / math.sqrt(hidden)
    w1 = jax.random.uniform(k1, (n_embd, hidden), jnp.float32, -lim1, lim1)
    b1 = jax.random.uniform(k2, (1, hidden), jnp.float32, -lim1, lim1)
    w2 = jax.random.uniform(k3, (hidden, n_embd), jnp.float32, -lim2, lim2)
    b2 = jax.random.uniform(k4, (1, n_embd), jnp.float32, -lim2, lim2)
    return w1, b1, w2, b2


def _reference(x, w1, b1, w2, b2):
    B, T, C = x.shape
    h = jnp.dot(x.reshape(-1, C), w1) + b1
    h = 0.5 * h * (1.0 + jax.lax.erf(h / jnp.sqrt(2.0)))
    return (jnp.dot(h, w2) + b2).reshape(B, T, C)


if __name__ == "__main__":
    # Small config: batch=2, seq=8, n_embd=32 -> hidden=128
    B, T, C = 2, 8, 32
    key = jax.random.PRNGKey(0)
    kx, kp = jax.random.split(key)
    x = jax.random.normal(kx, (B, T, C), jnp.float32)
    w1, b1, w2, b2 = init_params(kp, C)

    out = mlp_forward(x, w1, b1, w2, b2)
    out = jax.block_until_ready(out)

    ref = _reference(x, w1, b1, w2, b2)
    # bf16 matmul inputs with f32 accumulation -> loosened tolerance vs f32 ref.
    assert jnp.allclose(out, ref, atol=3e-2, rtol=3e-2), "mismatch vs reference"

    # Also exercise the M-padding path (M = 14 not a multiple of the tile).
    x_odd = jax.random.normal(jax.random.PRNGKey(1), (2, 7, C), jnp.float32)
    out_odd = jax.block_until_ready(mlp_forward(x_odd, w1, b1, w2, b2))
    ref_odd = _reference(x_odd, w1, b1, w2, b2)
    assert jnp.allclose(out_odd, ref_odd, atol=3e-2, rtol=3e-2), "padded mismatch"

    print("KERNEL_OK")
</pallas_src>

<mosaic_0001>
module attributes {stable_mosaic.version = 11 : i64} {
  func.func @mlp_kernel(%arg0: i32, %arg1: i32, %arg2: memref<16x32xbf16, #tpu.memory_space<vmem>>, %arg3: memref<32x128xbf16, #tpu.memory_space<vmem>>, %arg4: memref<1x128xf32, #tpu.memory_space<vmem>>, %arg5: memref<128x32xbf16, #tpu.memory_space<vmem>>, %arg6: memref<1x32xf32, #tpu.memory_space<vmem>>, %arg7: memref<16x32xf32, #tpu.memory_space<vmem>>, %arg8: memref<16x32xf32, #tpu.memory_space<vmem>>) attributes {dimension_semantics = [#tpu.dimension_semantics<parallel>, #tpu.dimension_semantics<arbitrary>], iteration_bounds = array<i64: 1, 1>, scalar_prefetch = 0 : i64, scratch_operands = 1 : i64, tpu.core_type = #tpu.core_type<tc>, window_params = [{transform_indices = @transform_0, window_bounds = array<i64: 16, 32>}, {transform_indices = @transform_1, window_bounds = array<i64: 32, 128>}, {transform_indices = @transform_2, window_bounds = array<i64: 1, 128>}, {transform_indices = @transform_3, window_bounds = array<i64: 128, 32>}, {pipeline_mode = #tpu.pipeline_mode<synchronous>, transform_indices = @transform_4, window_bounds = array<i64: 1, 32>}, {transform_indices = @transform_5, window_bounds = array<i64: 16, 32>}]} {
    %c0_i32 = arith.constant 0 : i32
    %0 = arith.cmpi eq, %arg1, %c0_i32 : i32
    %1 = arith.extui %0 : i1 to i32
    %c0_i32_0 = arith.constant 0 : i32
    %2 = arith.cmpi ne, %1, %c0_i32_0 : i32
    scf.if %2 {
      %cst_18 = arith.constant 0.000000e+00 : f32
      %26 = vector.broadcast %cst_18 : f32 to vector<16x32xf32>
      %c0_19 = arith.constant 0 : index
      %c0_20 = arith.constant 0 : index
      %27 = vector.load %arg8[%c0_19, %c0_20] : memref<16x32xf32, #tpu.memory_space<vmem>>, vector<16x32xf32>
      tpu.vector_store %arg8[%c0_19, %c0_20], %26 {strides = array<i32>} : memref<16x32xf32, #tpu.memory_space<vmem>>, vector<16x32xf32>,
    } else {
    }
    %c0 = arith.constant 0 : index
    %c0_1 = arith.constant 0 : index
    %3 = vector.load %arg2[%c0, %c0_1] : memref<16x32xbf16, #tpu.memory_space<vmem>>, vector<16x32xbf16>
    %c0_2 = arith.constant 0 : index
    %c0_3 = arith.constant 0 : index
    %4 = vector.load %arg3[%c0_2, %c0_3] : memref<32x128xbf16, #tpu.memory_space<vmem>>, vector<32x128xbf16>
    %cst = arith.constant dense<0.000000e+00> : vector<16x128xf32>
    %5 = tpu.matmul %3, %4, %cst {dimension_numbers = #tpu.dot_dimension_numbers<[1], [0], [0], [1], [0, 0, 1, 1], [], []>} : vector<16x32xbf16>, vector<32x128xbf16>, vector<16x128xf32> -> vector<16x128xf32>
    %c0_4 = arith.constant 0 : index
    %c0_5 = arith.constant 0 : index
    %6 = vector.load %arg4[%c0_4, %c0_5] : memref<1x128xf32, #tpu.memory_space<vmem>>, vector<1x128xf32>
    %7 = vector.broadcast %6 : vector<1x128xf32> to vector<16x128xf32>
    %8 = arith.addf %5, %7 : vector<16x128xf32>
    %cst_6 = arith.constant 5.000000e-01 : f32
    %9 = vector.broadcast %cst_6 : f32 to vector<16x128xf32>
    %10 = arith.mulf %9, %8 : vector<16x128xf32>
    %cst_7 = arith.constant 0.707106769 : f32
    %11 = vector.broadcast %cst_7 : f32 to vector<16x128xf32>
    %12 = arith.mulf %8, %11 : vector<16x128xf32>
    %13 = math.erf %12 : vector<16x128xf32>
    %cst_8 = arith.constant 1.000000e+00 : f32
    %14 = vector.broadcast %cst_8 : f32 to vector<16x128xf32>
    %15 = arith.addf %14, %13 : vector<16x128xf32>
    %16 = arith.mulf %10, %15 : vector<16x128xf32>
    %c0_9 = arith.constant 0 : index
    %c0_10 = arith.constant 0 : index
    %17 = vector.load %arg8[%c0_9, %c0_10] : memref<16x32xf32, #tpu.memory_space<vmem>>, vector<16x32xf32>
    %18 = arith.truncf %16 : vector<16x128xf32> to vector<16x128xbf16>
    %c0_11 = arith.constant 0 : index
    %c0_12 = arith.constant 0 : index
    %19 = vector.load %arg5[%c0_11, %c0_12] : memref<128x32xbf16, #tpu.memory_space<vmem>>, vector<128x32xbf16>
    %cst_13 = arith.constant dense<0.000000e+00> : vector<16x32xf32>
    %20 = tpu.matmul %18, %19, %cst_13 {dimension_numbers = #tpu.dot_dimension_numbers<[1], [0], [0], [1], [0, 0, 1, 1], [], []>} : vector<16x128xbf16>, vector<128x32xbf16>, vector<16x32xf32> -> vector<16x32xf32>
    %21 = arith.addf %17, %20 : vector<16x32xf32>
    %c0_14 = arith.constant 0 : index
    %c0_15 = arith.constant 0 : index
    %22 = vector.load %arg8[%c0_14, %c0_15] : memref<16x32xf32, #tpu.memory_space<vmem>>, vector<16x32xf32>
    tpu.vector_store %arg8[%c0_14, %c0_15], %21 {strides = array<i32>} : memref<16x32xf32, #tpu.memory_space<vmem>>, vector<16x32xf32>,
    %c0_i32_16 = arith.constant 0 : i32
    %23 = arith.cmpi eq, %arg1, %c0_i32_16 : i32
    %24 = arith.extui %23 : i1 to i32
    %c0_i32_17 = arith.constant 0 : i32
    %25 = arith.cmpi ne, %24, %c0_i32_17 : i32
    scf.if %25 {
      %c0_18 = arith.constant 0 : index
      %c0_19 = arith.constant 0 : index
      %26 = vector.load %arg8[%c0_18, %c0_19] : memref<16x32xf32, #tpu.memory_space<vmem>>, vector<16x32xf32>
      %c0_20 = arith.constant 0 : index
      %c0_21 = arith.constant 0 : index
      %27 = vector.load %arg6[%c0_20, %c0_21] : memref<1x32xf32, #tpu.memory_space<vmem>>, vector<1x32xf32>
      %28 = vector.broadcast %27 : vector<1x32xf32> to vector<16x32xf32>
      %29 = arith.addf %26, %28 : vector<16x32xf32>
      %c0_22 = arith.constant 0 : index
      %c0_23 = arith.constant 0 : index
      %30 = vector.load %arg7[%c0_22, %c0_23] : memref<16x32xf32, #tpu.memory_space<vmem>>, vector<16x32xf32>
      tpu.vector_store %arg7[%c0_22, %c0_23], %29 {strides = array<i32>} : memref<16x32xf32, #tpu.memory_space<vmem>>, vector<16x32xf32>,
    } else {
    }
    return
  }
  func.func @transform_0(%arg0: i32, %arg1: i32) -> (i32, i32) {
    %c0_i32 = arith.constant 0 : i32
    %c0_i32_0 = arith.constant 0 : i32
    return %arg0, %c0_i32 : i32, i32
  }
  func.func @transform_1(%arg0: i32, %arg1: i32) -> (i32, i32) {
    %c0_i32 = arith.constant 0 : i32
    %c0_i32_0 = arith.constant 0 : i32
    return %c0_i32, %arg1 : i32, i32
  }
  func.func @transform_2(%arg0: i32, %arg1: i32) -> (i32, i32) {
    %c0_i32 = arith.constant 0 : i32
    %c0_i32_0 = arith.constant 0 : i32
    return %c0_i32, %arg1 : i32, i32
  }
  func.func @transform_3(%arg0: i32, %arg1: i32) -> (i32, i32) {
    %c0_i32 = arith.constant 0 : i32
    %c0_i32_0 = arith.constant 0 : i32
    return %arg1, %c0_i32 : i32, i32
  }
  func.func @transform_4(%arg0: i32, %arg1: i32) -> (i32, i32) {
    %c0_i32 = arith.constant 0 : i32
    %c0_i32_0 = arith.constant 0 : i32
    %c0_i32_1 = arith.constant 0 : i32
    return %c0_i32, %c0_i32_0 : i32, i32
  }
  func.func @transform_5(%arg0: i32, %arg1: i32) -> (i32, i32) {
    %c0_i32 = arith.constant 0 : i32
    %c0_i32_0 = arith.constant 0 : i32
    return %arg0, %c0_i32 : i32, i32
  }
}

</mosaic_0001>

<llo_original>
// kernel: mlp_forward.1
$region0: #{mlp_forward.1}
  #allocation0 [shape = 'u32[]', space=smem, size = 0x4, offset = 0x4, fixed_abs, tag = 'smem constant byte address 0x4 - core index']
  #allocation1 [shape = 'u32[144,128]{1,0:T(1,128)}', space=vmem, size = 0x12000, scoped, tag = 'internal scratch']
  #allocation2 [shape = 'f32[16,32]{1,0:T(8,128)}', space=vmem, size = 0x2000, scoped, tag = 'scratch operand']
  %s0 = inlined_call_operand.vmem [shape: bf16[16,32], index: 0, kind: input, shape index: {}]
  %s1 = inlined_call_operand.vmem [shape: bf16[32,128], index: 1, kind: input, shape index: {}]
  %s2 = inlined_call_operand.vmem [shape: f32[1,128], index: 2, kind: input, shape index: {}]
  %s3 = inlined_call_operand.vmem [shape: bf16[128,32], index: 3, kind: input, shape index: {}]
  %s4 = inlined_call_operand.vmem [shape: f32[1,32], index: 4, kind: input, shape index: {}]
  %s5 = inlined_call_operand.hbm [shape: f32[16,32], index: 5, kind: output, shape index: {}]
  %s6 = sld [smem:[#allocation0]]
  $region38: #{mlp_forward.1} parent=0
    _
  %s8 = ssub.s32 1, %s6
  %s9 = scalar_select 0, %s8, %s6
  $region1: #{mlp_forward.1} parent=0
    #allocation3 [shape = 'u8[8192]{0}', space=vmem, size = 0x2000, scoped, tag = 'output window, operand 0, single buffered']
    #allocation4 [shape = 's32[1]{0}', space=sflag, size = 0x4, scoped, tag = 'scoped memory for mlp_forward.1']
    %10 = vsyncpa [#allocation4], 0
    // Predicated region
    $region2: #{mlp_forward.1} parent=1 // pred_check
      _
    $region3: #{mlp_forward.1} parent=1 // pred_check_branch
      %12 = sbr.rel (0) target = $region5
    $region4: #{mlp_forward.1} parent=1 // pred_region
      _
    $region5: #{mlp_forward.1} parent=1 // pred_fallthru
      _
    // Predicated region
    $region6: #{mlp_forward.1} parent=1 // pred_check
      _
    $region7: #{mlp_forward.1} parent=1 // pred_check_branch
      %14 = sbr.rel (0) target = $region9
    $region8: #{mlp_forward.1} parent=1 // pred_region
      _
    $region9: #{mlp_forward.1} parent=1 // pred_fallthru
      _
    // Predicated region
    $region10: #{mlp_forward.1} parent=1 // pred_check
      _
    $region11: #{mlp_forward.1} parent=1 // pred_check_branch
      %16 = sbr.rel (0) target = $region13
    $region12: #{mlp_forward.1} parent=1 // pred_region
      _
    $region13: #{mlp_forward.1} parent=1 // pred_fallthru
      _
    // Predicated region
    $region14: #{mlp_forward.1} parent=1 // pred_check
      _
    $region15: #{mlp_forward.1} parent=1 // pred_check_branch
      %18 = sbr.rel (0) target = $region17
    $region16: #{mlp_forward.1} parent=1 // pred_region
      _
    $region17: #{mlp_forward.1} parent=1 // pred_fallthru
      _
    // Predicated region
    $region18: #{mlp_forward.1} parent=1 // pred_check
      _
    $region19: #{mlp_forward.1} parent=1 // pred_check_branch
      %20 = sbr.rel (0) target = $region21
    $region20: #{mlp_forward.1} parent=1 // pred_region
      _
    $region21: #{mlp_forward.1} parent=1 // pred_fallthru
      _
    %p22 = scmp.eq.s32.totalorder 0, 0
    // Predicated region
    $region22: #{mlp_forward.1} parent=1 // pred_check
      %p23 = pneg %p22
    $region23: #{mlp_forward.1} parent=1 // pred_check_branch
      %25 = sbr.rel (%p23) target = $region25
    $region24: #{mlp_forward.1} parent=1 // pred_region
      %vm26 = vcmask 261120
      %27 = vst.msk [vmem:[#allocation2] sm:$0xff] %vm26, 0.0
      %28 = vst.msk [vmem:[#allocation2 + $0x8] sm:$0xff] %vm26, 0.0
    $region25: #{mlp_forward.1} parent=1 // pred_fallthru
      _
    %v29 = vld [vmem:[%s0] sm:$0xf]
    %v30 = vld [vmem:[%s0 + $0x4] sm:$0xf]
    %v31 = vld [vmem:[%s1] sm:$0xf]
    %v32 = vld [vmem:[%s1 + $0x4] sm:$0xf]
    %v33 = vld [vmem:[%s1 + $0x8] sm:$0xf]
    %v34 = vld [vmem:[%s1 + $0xc] sm:$0xf]
    %v35 = vld [vmem:[%s2] sm:$0x1]
    %v37 = vlaneseq
    %v38 = vshrl.u32 %v37, 7
    %v39 = vsub.s32 0, %v38
    %v40 = vrot.slane %v35, %v39
    %v44 = vunpack.c.l.b16 %v29
    %v45 = vunpack.c.l.b16 %v30
    %v46 = vpack.c.b16 %v45, %v44
    %v51 = vunpack.c.l.b16 %v31
    %v52 = vunpack.c.l.b16 %v32
    %v53 = vunpack.c.l.b16 %v33
    %v54 = vunpack.c.l.b16 %v34
    %v55 = vpack.c.b16 %v52, %v51
    %v56 = vpack.c.b16 %v54, %v53
    %vm59 = vcmask 261120
    %v61 = vsel %vm59, %v46, 0
    %63 = vmatprep.subr.bf16.mxu0 0
    %64 = vmatpush1.bf16.msra.mxu0 %v55
    %65 = vmatprep.subr.bf16.mxu0 0
    %66 = vmatpush1.bf16.msra.mxu0 %v56
    %67 = vmatprep.subr.bf16.mxu0 0
    %68 = vmatpush1.bf16.msra.mxu0 0
    %69 = vmatprep.subr.bf16.mxu0 0
    %70 = vmatpush1.bf16.msra.mxu0 0
    %71 = vmatprep.subr.bf16.mxu0 0
    %72 = vmatpush1.bf16.msra.mxu0 0
    %73 = vmatprep.subr.bf16.mxu0 0
    %74 = vmatpush1.bf16.msra.mxu0 0
    %75 = vmatprep.subr.bf16.mxu0 0
    %76 = vmatpush1.bf16.msra.mxu0 0
    %77 = vmatprep.subr.bf16.mxu0 0
    %78 = vmatpush1.bf16.msra.mxu0 0
    %79 = vmatprep.subr.bf16.mxu0 0
    %80 = vmatpush1.bf16.msra.mxu0 0
    %81 = vmatprep.subr.bf16.mxu0 0
    %82 = vmatpush1.bf16.msra.mxu0 0
    %83 = vmatprep.subr.bf16.mxu0 0
    %84 = vmatpush1.bf16.msra.mxu0 0
    %85 = vmatprep.subr.bf16.mxu0 0
    %86 = vmatpush1.bf16.msra.mxu0 0
    %87 = vmatprep.subr.bf16.mxu0 0
    %88 = vmatpush1.bf16.msra.mxu0 0
    %89 = vmatprep.subr.bf16.mxu0 0
    %90 = vmatpush1.bf16.msra.mxu0 0
    %91 = vmatprep.subr.bf16.mxu0 0
    %92 = vmatpush1.bf16.msra.mxu0 0
    %93 = vmatprep.subr.bf16.mxu0 0
    %94 = vmatpush1.bf16.msra.mxu0 0
    %95 = vmatprep.mubr.bf16.mxu0 0
    %96 = vmatmul.mubr.bf16.gmra.mrb[0].mxu0 %v61
    %v97 = vpop.f32.mrb[0].mxu0
    %v98 = vadd.f32 %v40, %v97
    %v99 = vpop.f32.mrb[0].mxu0
    %v100 = vpop.f32.mrb[0].mxu0
    %v101 = vadd.f32 %v40, %v100
    %v102 = vpop.f32.mrb[0].mxu0
    %103 = vdwg.mxu0
    %v104 = vmul.f32 %v98, 0.5
    %v105 = vmul.f32 %v101, 0.5
    %v106 = vmul.f32 %v98, 0.70710677
    %v107 = vmul.f32 %v101, 0.70710677
    %v108 = verf.f32.pop %v106
    %v109 = verf.f32.pop %v107
    %v110 = vadd.f32 %v108, 1.0
    %v111 = vadd.f32 %v109, 1.0
    %v112 = vmul.f32 %v104, %v110
    %v113 = vmul.f32 %v105, %v111
    %v114 = vld [vmem:[#allocation2] sm:$0xff]
    %v115 = vld [vmem:[#allocation2 + $0x8] sm:$0xff]
    %v116 = vpack.c.bf16 %v113, %v112
    %v117 = vld [vmem:[%s3] sm:$0xf]
    %v118 = vld [vmem:[%s3 + $0x4] sm:$0xf]
    %v119 = vld [vmem:[%s3 + $0x8] sm:$0xf]
    %v120 = vld [vmem:[%s3 + $0xc] sm:$0xf]
    %v121 = vld [vmem:[%s3 + $0x10] sm:$0xf]
    %v122 = vld [vmem:[%s3 + $0x14] sm:$0xf]
    %v123 = vld [vmem:[%s3 + $0x18] sm:$0xf]
    %v124 = vld [vmem:[%s3 + $0x1c] sm:$0xf]
    %v125 = vld [vmem:[%s3 + $0x20] sm:$0xf]
    %v126 = vld [vmem:[%s3 + $0x24] sm:$0xf]
    %v127 = vld [vmem:[%s3 + $0x28] sm:$0xf]
    %v128 = vld [vmem:[%s3 + $0x2c] sm:$0xf]
    %v129 = vld [vmem:[%s3 + $0x30] sm:$0xf]
    %v130 = vld [vmem:[%s3 + $0x34] sm:$0xf]
    %v131 = vld [vmem:[%s3 + $0x38] sm:$0xf]
    %v132 = vld [vmem:[%s3 + $0x3c] sm:$0xf]
    %v149 = vunpack.c.l.b16 %v117
    %v150 = vunpack.c.l.b16 %v118
    %v151 = vunpack.c.l.b16 %v119
    %v152 = vunpack.c.l.b16 %v120
    %v153 = vunpack.c.l.b16 %v121
    %v154 = vunpack.c.l.b16 %v122
    %v155 = vunpack.c.l.b16 %v123
    %v156 = vunpack.c.l.b16 %v124
    %v157 = vunpack.c.l.b16 %v125
    %v158 = vunpack.c.l.b16 %v126
    %v159 = vunpack.c.l.b16 %v127
    %v160 = vunpack.c.l.b16 %v128
    %v161 = vunpack.c.l.b16 %v129
    %v162 = vunpack.c.l.b16 %v130
    %v163 = vunpack.c.l.b16 %v131
    %v164 = vunpack.c.l.b16 %v132
    %v165 = vpack.c.b16 %v150, %v149
    %v166 = vpack.c.b16 %v152, %v151
    %v167 = vpack.c.b16 %v154, %v153
    %v168 = vpack.c.b16 %v156, %v155
    %v169 = vpack.c.b16 %v158, %v157
    %v170 = vpack.c.b16 %v160, %v159
    %v171 = vpack.c.b16 %v162, %v161
    %v172 = vpack.c.b16 %v164, %v163
    %181 = vmatprep.subr.bf16.mxu0 0
    %182 = vmatpush1.bf16.msra.mxu0 %v165
    %183 = vmatprep.subr.bf16.mxu0 0
    %184 = vmatpush1.bf16.msra.mxu0 %v166
    %185 = vmatprep.subr.bf16.mxu0 0
    %186 = vmatpush1.bf16.msra.mxu0 %v167
    %187 = vmatprep.subr.bf16.mxu0 0
    %188 = vmatpush1.bf16.msra.mxu0 %v168
    %189 = vmatprep.subr.bf16.mxu0 0
    %190 = vmatpush1.bf16.msra.mxu0 %v169
    %191 = vmatprep.subr.bf16.mxu0 0
    %192 = vmatpush1.bf16.msra.mxu0 %v170
    %193 = vmatprep.subr.bf16.mxu0 0
    %194 = vmatpush1.bf16.msra.mxu0 %v171
    %195 = vmatprep.subr.bf16.mxu0 0
    %196 = vmatpush1.bf16.msra.mxu0 %v172
    %197 = vmatprep.subr.bf16.mxu0 0
    %198 = vmatpush1.bf16.msra.mxu0 0
    %199 = vmatprep.subr.bf16.mxu0 0
    %200 = vmatpush1.bf16.msra.mxu0 0
    %201 = vmatprep.subr.bf16.mxu0 0
    %202 = vmatpush1.bf16.msra.mxu0 0
    %203 = vmatprep.subr.bf16.mxu0 0
    %204 = vmatpush1.bf16.msra.mxu0 0
    %205 = vmatprep.subr.bf16.mxu0 0
    %206 = vmatpush1.bf16.msra.mxu0 0
    %207 = vmatprep.subr.bf16.mxu0 0
    %208 = vmatpush1.bf16.msra.mxu0 0
    %209 = vmatprep.subr.bf16.mxu0 0
    %210 = vmatpush1.bf16.msra.mxu0 0
    %211 = vmatprep.subr.bf16.mxu0 0
    %212 = vmatpush1.bf16.msra.mxu0 0
    %213 = vmatprep.mubr.bf16.mxu0 0
    %214 = vmatmul.mubr.bf16.gmra.mrb[0].mxu0 %v116
    %v215 = vpop.f32.mrb[0].mxu0
    %v216 = vadd.f32 0.0, %v215
    %v217 = vpop.f32.mrb[0].mxu0
    %v218 = vpop.f32.mrb[0].mxu0
    %v219 = vadd.f32 0.0, %v218
    %v220 = vpop.f32.mrb[0].mxu0
    %221 = vdwg.mxu0
    %v222 = vadd.f32 %v114, %v216
    %v223 = vadd.f32 %v115, %v219
    %224 = vst.msk [vmem:[#allocation2] sm:$0xff] %vm59, %v222
    %225 = vst.msk [vmem:[#allocation2 + $0x8] sm:$0xff] %vm59, %v223
    // Predicated region
    $region26: #{mlp_forward.1} parent=1 // pred_check
      %p226 = pneg %p22
    $region27: #{mlp_forward.1} parent=1 // pred_check_branch
      %228 = sbr.rel (%p226) target = $region29
    $region28: #{mlp_forward.1} parent=1 // pred_region
      %v229 = vld [vmem:[#allocation2] sm:$0xff]
      %v230 = vld [vmem:[#allocation2 + $0x8] sm:$0xff]
      %v231 = vld [vmem:[%s4] sm:$0x1]
      %v233 = vlaneseq
      %v234 = vshrl.u32 %v233, 7
      %v235 = vsub.s32 0, %v234
      %v236 = vrot.slane %v231, %v235
      %v238 = vadd.f32 %v229, %v236
      %v239 = vadd.f32 %v230, %v236
      %240 = vst.msk [vmem:[#allocation3] sm:$0xff] %vm59, %v238
      %241 = vst.msk [vmem:[#allocation3 + $0x8] sm:$0xff] %vm59, %v239
    $region29: #{mlp_forward.1} parent=1 // pred_fallthru
      _
    // Predicated region
    $region30: #{mlp_forward.1} parent=1 // pred_check
      _
    $region31: #{mlp_forward.1} parent=1 // pred_check_branch
      %243 = sbr.rel (0) target = $region33
    $region32: #{mlp_forward.1} parent=1 // pred_region
      %s245 = ssub.s32 256, 256
      %246 = vsyncadd [#allocation4], %s245
      %s247 = sshll.u32 [#allocation3], 4
      %s248 = int_to_ptr.vmem [resolvable:$true] %s247
      %253 = dma.vmem_to_hbm [thread:$0]  %s248, 256, %s5, [#allocation4], 128, 128, 8
    $region33: #{mlp_forward.1} parent=1 // pred_fallthru
      _
    // Predicated region
    $region34: #{mlp_forward.1} parent=1 // pred_check
      _
    $region35: #{mlp_forward.1} parent=1 // pred_check_branch
      %255 = sbr.rel (0) target = $region37
    $region36: #{mlp_forward.1} parent=1 // pred_region
      %256 = dma.done [#allocation4], 256
    $region37: #{mlp_forward.1} parent=1 // pred_fallthru
      _
    %257 = vsyncpa [#allocation4], 1

</llo_original>
